<compile_context>
chip_gen: v5e
topology: v5e:2x2
jax: 0.10.0
libtpu: 0.0.40
codegen_flags: <defaults>
</compile_context>

<pallas_src>
import math
import jax
import jax.numpy as jnp
from jax.experimental import pallas as pl
from jax.experimental.pallas import tpu as pltpu


# ----------------------------------------------------------------------------
# Fused kernel: per (batch, head) QKV projection + attention + output-projection
# accumulation.  Grid = (B, NH); the NH axis is the reduction axis.
# ----------------------------------------------------------------------------
def _fused_attention_kernel(x_ref, wqkv_ref, bqkv_ref, wo_ref, bo_ref,
                            out_ref, w_ref, acc_ref):
    h = pl.program_id(1)
    last_h = pl.num_programs(1) - 1
    hd = wo_ref.shape[1]                      # head dim (static)
    scale = 1.0 / math.sqrt(hd)
    cdt = x_ref.dtype                         # MXU input dtype (f32 or bf16)

    @pl.when(h == 0)
    def _init():
        acc_ref[...] = jnp.zeros_like(acc_ref)

    x = x_ref[0]                              # (S, H)
    wqkv = wqkv_ref[h]                        # (H, 3*HD)  -- resident in VMEM, sliced per head

    # Single fused QKV matmul (N = 3*HD), f32 accumulation, f32 bias add.
    qkv = jnp.dot(x, wqkv, preferred_element_type=jnp.float32) + bqkv_ref[h]   # (S, 3*HD)

    # Fold the 1/sqrt(HD) scale into q (fewer VPU multiplies than scaling scores).
    q = (qkv[:, 0:hd] * scale).astype(cdt)    # (S, HD)
    k = qkv[:, hd:2 * hd].astype(cdt)         # (S, HD)
    v = qkv[:, 2 * hd:3 * hd].astype(cdt)     # (S, HD)

    # scores = q @ k^T  (contract the HD axis of both; avoids an explicit transpose)
    s = jax.lax.dot_general(q, k, dimension_numbers=(((1,), (1,)), ((), ())),
                            preferred_element_type=jnp.float32)                # (S, S)

    # Numerically-stable softmax in f32; divide via EUP approximate reciprocal.
    s = s - jnp.max(s, axis=-1, keepdims=True)
    e = jnp.exp(s)
    probs = e * pl.reciprocal(jnp.sum(e, axis=-1, keepdims=True), approx=True)

    # Attention weights output (per-head block, written every step).
    w_ref[0, 0] = probs.astype(w_ref.dtype)

    # context = probs @ v, then accumulate the output projection for this head.
    ctx = jnp.dot(probs.astype(cdt), v, preferred_element_type=jnp.float32)    # (S, HD)
    acc_ref[...] += jnp.dot(ctx.astype(cdt), wo_ref[h],
                            preferred_element_type=jnp.float32)                # (S, H)

    @pl.when(h == last_h)
    def _finalize():
        out_ref[0] = (acc_ref[...] + bo_ref[...]).astype(out_ref.dtype)


def attention_forward(x, params, num_heads, *, mxu_dtype=None):
    """x: (B, S, H).  Returns (output (B, S, H), attention weights (B, NH, S, S)).

    mxu_dtype: optional dtype (e.g. jnp.bfloat16) for the MXU matmul inputs;
    accumulation, softmax, and both outputs stay in f32 / x.dtype.
    """
    B, S, H = x.shape
    NH = num_heads
    HD = H // NH
    out_dtype = x.dtype

    # ---- host-side (XLA glue) weight prep; in a real model do this once at init ----
    # (in, out) weight layout: y = x @ W + b.  Output dim H is laid out [head0 HD | head1 HD | ...].
    def per_head(w):                                  # (H, H) -> (NH, H, HD)
        return w.reshape(H, NH, HD).transpose(1, 0, 2)

    wqkv = jnp.concatenate(
        [per_head(params["wq"]), per_head(params["wk"]), per_head(params["wv"])],
        axis=-1)                                      # (NH, H, 3*HD)
    bqkv = jnp.concatenate(
        [params["bq"].reshape(NH, HD), params["bk"].reshape(NH, HD),
         params["bv"].reshape(NH, HD)], axis=-1)[:, None, :].astype(jnp.float32)  # (NH, 1, 3*HD)
    wo = params["wo"].reshape(NH, HD, H)              # (NH, HD, H)  rows h*HD:(h+1)*HD -> head h
    bo = params["bo"][None, :].astype(jnp.float32)    # (1, H)

    if mxu_dtype is not None:
        x = x.astype(mxu_dtype)
        wqkv = wqkv.astype(mxu_dtype)
        wo = wo.astype(mxu_dtype)

    out, weights = pl.pallas_call(
        _fused_attention_kernel,
        out_shape=(
            jax.ShapeDtypeStruct((B, S, H), out_dtype),
            jax.ShapeDtypeStruct((B, NH, S, S), jnp.float32),
        ),
        grid_spec=pltpu.PrefetchScalarGridSpec(
            num_scalar_prefetch=0,
            grid=(B, NH),
            in_specs=[
                # x: fetched once per batch element (constant across the inner head axis)
                pl.BlockSpec((1, S, H), lambda b, h: (b, 0, 0)),
                # fused per-head QKV weight / bias: constant index -> DMA'd exactly once
                pl.BlockSpec((NH, H, 3 * HD), lambda b, h: (0, 0, 0)),
                pl.BlockSpec((NH, 1, 3 * HD), lambda b, h: (0, 0, 0)),
                # per-head output-projection weight + bias: resident as well
                pl.BlockSpec((NH, HD, H), lambda b, h: (0, 0, 0)),
                pl.BlockSpec((1, H), lambda b, h: (0, 0)),
            ],
            out_specs=[
                # output block revisited across heads (accumulator), lane-dense last dim H
                pl.BlockSpec((1, S, H), lambda b, h: (b, 0, 0)),
                # per-head attention weights
                pl.BlockSpec((1, 1, S, S), lambda b, h: (b, h, 0, 0)),
            ],
            scratch_shapes=[pltpu.VMEM((S, H), jnp.float32)],
        ),
        compiler_params=pltpu.CompilerParams(
            dimension_semantics=("parallel", "arbitrary"),
            vmem_limit_bytes=48 * 1024 * 1024,
        ),
    )(x, wqkv, bqkv, wo, bo)

    return out, weights


# ----------------------------------------------------------------------------
# Pure-JAX reference (mirrors the PyTorch forward, dropout = identity)
# ----------------------------------------------------------------------------
def attention_reference(x, params, num_heads):
    B, S, H = x.shape
    NH = num_heads
    HD = H // NH

    def lin(t, w, b):
        return t @ w + b

    def heads(t):
        return t.reshape(B, S, NH, HD).transpose(0, 2, 1, 3)

    q = heads(lin(x, params["wq"], params["bq"]))
    k = heads(lin(x, params["wk"], params["bk"]))
    v = heads(lin(x, params["wv"], params["bv"]))

    scores = jnp.einsum("bhqd,bhkd->bhqk", q, k) / math.sqrt(HD)
    probs = jax.nn.softmax(scores, axis=-1)
    ctx = jnp.einsum("bhqk,bhkd->bhqd", probs, v)
    ctx = ctx.transpose(0, 2, 1, 3).reshape(B, S, H)
    out = lin(ctx, params["wo"], params["bo"])
    return out, probs


if __name__ == "__main__":
    # Small shapes consistent with the module: batch=2, seq=8, hidden=32, heads=4
    B, S, H, NH = 2, 8, 32, 4

    key = jax.random.PRNGKey(0)
    ks = jax.random.split(key, 9)
    x = jax.random.normal(ks[0], (B, S, H), dtype=jnp.float32)

    # Deterministic synthetic parameters. Weights stored in (in, out) layout,
    # i.e. y = x @ W + b  (equivalent to PyTorch's x @ W_torch.T + b).
    params = {
        "wq": 0.05 * jax.random.normal(ks[1], (H, H), dtype=jnp.float32),
        "bq": 0.05 * jax.random.normal(ks[2], (H,), dtype=jnp.float32),
        "wk": 0.05 * jax.random.normal(ks[3], (H, H), dtype=jnp.float32),
        "bk": 0.05 * jax.random.normal(ks[4], (H,), dtype=jnp.float32),
        "wv": 0.05 * jax.random.normal(ks[5], (H, H), dtype=jnp.float32),
        "bv": 0.05 * jax.random.normal(ks[6], (H,), dtype=jnp.float32),
        "wo": 0.05 * jax.random.normal(ks[7], (H, H), dtype=jnp.float32),
        "bo": 0.05 * jax.random.normal(ks[8], (H,), dtype=jnp.float32),
    }

    ref_out, ref_w = attention_reference(x, params, NH)

    # f32 path (tolerance allows the EUP approximate reciprocal in the softmax)
    out, weights = attention_forward(x, params, NH)
    out, weights = jax.block_until_ready((out, weights))
    assert out.shape == (B, S, H)
    assert weights.shape == (B, NH, S, S)
    assert jnp.allclose(out, ref_out, atol=2e-3, rtol=2e-3)
    assert jnp.allclose(weights, ref_w, atol=2e-3, rtol=2e-3)

    # bf16 MXU-input path (f32 accumulation / softmax); looser tolerance
    out_bf, weights_bf = attention_forward(x, params, NH, mxu_dtype=jnp.bfloat16)
    out_bf, weights_bf = jax.block_until_ready((out_bf, weights_bf))
    assert out_bf.shape == (B, S, H) and out_bf.dtype == x.dtype
    assert jnp.allclose(out_bf, ref_out, atol=3e-2, rtol=3e-2)
    assert jnp.allclose(weights_bf, ref_w, atol=3e-2, rtol=3e-2)

    print("KERNEL_OK")
</pallas_src>

<mosaic_0001>
module attributes {stable_mosaic.version = 11 : i64} {
  func.func @_fused_attention_kernel(%arg0: i32, %arg1: i32, %arg2: memref<1x8x32xf32, #tpu.memory_space<vmem>>, %arg3: memref<4x32x24xf32, #tpu.memory_space<vmem>>, %arg4: memref<4x1x24xf32, #tpu.memory_space<vmem>>, %arg5: memref<4x8x32xf32, #tpu.memory_space<vmem>>, %arg6: memref<1x32xf32, #tpu.memory_space<vmem>>, %arg7: memref<1x8x32xf32, #tpu.memory_space<vmem>>, %arg8: memref<1x1x8x8xf32, #tpu.memory_space<vmem>>, %arg9: memref<8x32xf32, #tpu.memory_space<vmem>>) attributes {dimension_semantics = [#tpu.dimension_semantics<parallel>, #tpu.dimension_semantics<arbitrary>], iteration_bounds = array<i64: 2, 4>, scalar_prefetch = 0 : i64, scratch_operands = 1 : i64, tpu.core_type = #tpu.core_type<tc>, window_params = [{transform_indices = @transform_0, window_bounds = array<i64: 1, 8, 32>}, {pipeline_mode = #tpu.pipeline_mode<synchronous>, transform_indices = @transform_1, window_bounds = array<i64: 4, 32, 24>}, {pipeline_mode = #tpu.pipeline_mode<synchronous>, transform_indices = @transform_2, window_bounds = array<i64: 4, 1, 24>}, {pipeline_mode = #tpu.pipeline_mode<synchronous>, transform_indices = @transform_3, window_bounds = array<i64: 4, 8, 32>}, {pipeline_mode = #tpu.pipeline_mode<synchronous>, transform_indices = @transform_4, window_bounds = array<i64: 1, 32>}, {transform_indices = @transform_5, window_bounds = array<i64: 1, 8, 32>}, {transform_indices = @transform_6, window_bounds = array<i64: 1, 1, 8, 8>}]} {
    %c0_i32 = arith.constant 0 : i32
    %0 = arith.cmpi eq, %arg1, %c0_i32 : i32
    %1 = arith.extui %0 : i1 to i32
    %c0_i32_0 = arith.constant 0 : i32
    %2 = arith.cmpi ne, %1, %c0_i32_0 : i32
    scf.if %2 {
      %cst_24 = arith.constant 0.000000e+00 : f32
      %44 = vector.broadcast %cst_24 : f32 to vector<8x32xf32>
      %c0_25 = arith.constant 0 : index
      %c0_26 = arith.constant 0 : index
      %45 = vector.load %arg9[%c0_25, %c0_26] : memref<8x32xf32, #tpu.memory_space<vmem>>, vector<8x32xf32>
      tpu.vector_store %arg9[%c0_25, %c0_26], %44 {strides = array<i32>} : memref<8x32xf32, #tpu.memory_space<vmem>>, vector<8x32xf32>,
    } else {
    }
    %c0 = arith.constant 0 : index
    %c0_1 = arith.constant 0 : index
    %c0_2 = arith.constant 0 : index
    %3 = vector.load %arg2[%c0, %c0_1, %c0_2] : memref<1x8x32xf32, #tpu.memory_space<vmem>>, vector<1x8x32xf32>
    %4 = vector.shape_cast %3 : vector<1x8x32xf32> to vector<8x32xf32>
    %5 = arith.index_cast %arg1 : i32 to index
    %c0_3 = arith.constant 0 : index
    %c0_4 = arith.constant 0 : index
    %6 = vector.load %arg3[%5, %c0_3, %c0_4] : memref<4x32x24xf32, #tpu.memory_space<vmem>>, vector<1x32x24xf32>
    %7 = vector.shape_cast %6 : vector<1x32x24xf32> to vector<32x24xf32>
    %cst = arith.constant dense<0.000000e+00> : vector<8x24xf32>
    %8 = tpu.matmul %4, %7, %cst {dimension_numbers = #tpu.dot_dimension_numbers<[1], [0], [0], [1], [0, 0, 1, 1], [], []>} : vector<8x32xf32>, vector<32x24xf32>, vector<8x24xf32> -> vector<8x24xf32>
    %9 = arith.index_cast %arg1 : i32 to index
    %c0_5 = arith.constant 0 : index
    %c0_6 = arith.constant 0 : index
    %10 = vector.load %arg4[%9, %c0_5, %c0_6] : memref<4x1x24xf32, #tpu.memory_space<vmem>>, vector<1x1x24xf32>
    %11 = vector.shape_cast %10 : vector<1x1x24xf32> to vector<1x24xf32>
    %12 = vector.broadcast %11 : vector<1x24xf32> to vector<8x24xf32>
    %13 = arith.addf %8, %12 : vector<8x24xf32>
    %14 = vector.extract_strided_slice %13 {offsets = [0, 0], sizes = [8, 8], strides = [1, 1]} : vector<8x24xf32> to vector<8x8xf32>
    %cst_7 = arith.constant 0.353553385 : f32
    %15 = vector.broadcast %cst_7 : f32 to vector<8x8xf32>
    %16 = arith.mulf %14, %15 : vector<8x8xf32>
    %17 = vector.extract_strided_slice %13 {offsets = [0, 8], sizes = [8, 8], strides = [1, 1]} : vector<8x24xf32> to vector<8x8xf32>
    %18 = vector.extract_strided_slice %13 {offsets = [0, 16], sizes = [8, 8], strides = [1, 1]} : vector<8x24xf32> to vector<8x8xf32>
    %cst_8 = arith.constant dense<0.000000e+00> : vector<8x8xf32>
    %19 = tpu.matmul %16, %17, %cst_8 {dimension_numbers = #tpu.dot_dimension_numbers<[1], [1], [0], [0], [0, 0, 1, 0], [], []>} : vector<8x8xf32>, vector<8x8xf32>, vector<8x8xf32> -> vector<8x8xf32>
    %cst_9 = arith.constant dense<0xFF800000> : vector<8xf32>
    %20 = vector.multi_reduction <maximumf>, %19, %cst_9 [1] : vector<8x8xf32> to vector<8xf32>
    %21 = vector.shape_cast %20 : vector<8xf32> to vector<8x1xf32>
    %22 = vector.broadcast %21 : vector<8x1xf32> to vector<8x8xf32>
    %23 = arith.subf %19, %22 : vector<8x8xf32>
    %24 = math.exp %23 : vector<8x8xf32>
    %cst_10 = arith.constant dense<0.000000e+00> : vector<8xf32>
    %25 = vector.multi_reduction <add>, %24, %cst_10 [1] : vector<8x8xf32> to vector<8xf32>
    %26 = vector.shape_cast %25 : vector<8xf32> to vector<8x1xf32>
    %27 = tpu.reciprocal %26 {approx = true} : vector<8x1xf32> -> vector<8x1xf32>
    %28 = vector.broadcast %27 : vector<8x1xf32> to vector<8x8xf32>
    %29 = arith.mulf %24, %28 : vector<8x8xf32>
    %c0_11 = arith.constant 0 : index
    %c0_12 = arith.constant 0 : index
    %c0_13 = arith.constant 0 : index
    %c0_14 = arith.constant 0 : index
    %30 = vector.load %arg8[%c0_11, %c0_12, %c0_13, %c0_14] : memref<1x1x8x8xf32, #tpu.memory_space<vmem>>, vector<1x1x8x8xf32>
    %31 = vector.shape_cast %30 : vector<1x1x8x8xf32> to vector<8x8xf32>
    %32 = vector.shape_cast %29 : vector<8x8xf32> to vector<1x1x8x8xf32>
    tpu.vector_store %arg8[%c0_11, %c0_12, %c0_13, %c0_14], %32 {strides = array<i32>} : memref<1x1x8x8xf32, #tpu.memory_space<vmem>>, vector<1x1x8x8xf32>,
    %cst_15 = arith.constant dense<0.000000e+00> : vector<8x8xf32>
    %33 = tpu.matmul %29, %18, %cst_15 {dimension_numbers = #tpu.dot_dimension_numbers<[1], [0], [0], [1], [0, 0, 1, 1], [], []>} : vector<8x8xf32>, vector<8x8xf32>, vector<8x8xf32> -> vector<8x8xf32>
    %c0_16 = arith.constant 0 : index
    %c0_17 = arith.constant 0 : index
    %34 = vector.load %arg9[%c0_16, %c0_17] : memref<8x32xf32, #tpu.memory_space<vmem>>, vector<8x32xf32>
    %35 = arith.index_cast %arg1 : i32 to index
    %c0_18 = arith.constant 0 : index
    %c0_19 = arith.constant 0 : index
    %36 = vector.load %arg5[%35, %c0_18, %c0_19] : memref<4x8x32xf32, #tpu.memory_space<vmem>>, vector<1x8x32xf32>
    %37 = vector.shape_cast %36 : vector<1x8x32xf32> to vector<8x32xf32>
    %cst_20 = arith.constant dense<0.000000e+00> : vector<8x32xf32>
    %38 = tpu.matmul %33, %37, %cst_20 {dimension_numbers = #tpu.dot_dimension_numbers<[1], [0], [0], [1], [0, 0, 1, 1], [], []>} : vector<8x8xf32>, vector<8x32xf32>, vector<8x32xf32> -> vector<8x32xf32>
    %39 = arith.addf %34, %38 : vector<8x32xf32>
    %c0_21 = arith.constant 0 : index
    %c0_22 = arith.constant 0 : index
    %40 = vector.load %arg9[%c0_21, %c0_22] : memref<8x32xf32, #tpu.memory_space<vmem>>, vector<8x32xf32>
    tpu.vector_store %arg9[%c0_21, %c0_22], %39 {strides = array<i32>} : memref<8x32xf32, #tpu.memory_space<vmem>>, vector<8x32xf32>,
    %c3_i32 = arith.constant 3 : i32
    %41 = arith.cmpi eq, %arg1, %c3_i32 : i32
    %42 = arith.extui %41 : i1 to i32
    %c0_i32_23 = arith.constant 0 : i32
    %43 = arith.cmpi ne, %42, %c0_i32_23 : i32
    scf.if %43 {
      %c0_24 = arith.constant 0 : index
      %c0_25 = arith.constant 0 : index
      %44 = vector.load %arg9[%c0_24, %c0_25] : memref<8x32xf32, #tpu.memory_space<vmem>>, vector<8x32xf32>
      %c0_26 = arith.constant 0 : index
      %c0_27 = arith.constant 0 : index
      %45 = vector.load %arg6[%c0_26, %c0_27] : memref<1x32xf32, #tpu.memory_space<vmem>>, vector<1x32xf32>
      %46 = vector.broadcast %45 : vector<1x32xf32> to vector<8x32xf32>
      %47 = arith.addf %44, %46 : vector<8x32xf32>
      %c0_28 = arith.constant 0 : index
      %c0_29 = arith.constant 0 : index
      %c0_30 = arith.constant 0 : index
      %48 = vector.load %arg7[%c0_28, %c0_29, %c0_30] : memref<1x8x32xf32, #tpu.memory_space<vmem>>, vector<1x8x32xf32>
      %49 = vector.shape_cast %48 : vector<1x8x32xf32> to vector<8x32xf32>
      %50 = vector.shape_cast %47 : vector<8x32xf32> to vector<1x8x32xf32>
      tpu.vector_store %arg7[%c0_28, %c0_29, %c0_30], %50 {strides = array<i32>} : memref<1x8x32xf32, #tpu.memory_space<vmem>>, vector<1x8x32xf32>,
    } else {
    }
    return
  }
  func.func @transform_0(%arg0: i32, %arg1: i32) -> (i32, i32, i32) {
    %c0_i32 = arith.constant 0 : i32
    %c0_i32_0 = arith.constant 0 : i32
    %c0_i32_1 = arith.constant 0 : i32
    return %arg0, %c0_i32, %c0_i32_0 : i32, i32, i32
  }
  func.func @transform_1(%arg0: i32, %arg1: i32) -> (i32, i32, i32) {
    %c0_i32 = arith.constant 0 : i32
    %c0_i32_0 = arith.constant 0 : i32
    %c0_i32_1 = arith.constant 0 : i32
    %c0_i32_2 = arith.constant 0 : i32
    return %c0_i32, %c0_i32_0, %c0_i32_1 : i32, i32, i32
  }
  func.func @transform_2(%arg0: i32, %arg1: i32) -> (i32, i32, i32) {
    %c0_i32 = arith.constant 0 : i32
    %c0_i32_0 = arith.constant 0 : i32
    %c0_i32_1 = arith.constant 0 : i32
    %c0_i32_2 = arith.constant 0 : i32
    return %c0_i32, %c0_i32_0, %c0_i32_1 : i32, i32, i32
  }
  func.func @transform_3(%arg0: i32, %arg1: i32) -> (i32, i32, i32) {
    %c0_i32 = arith.constant 0 : i32
    %c0_i32_0 = arith.constant 0 : i32
    %c0_i32_1 = arith.constant 0 : i32
    %c0_i32_2 = arith.constant 0 : i32
    return %c0_i32, %c0_i32_0, %c0_i32_1 : i32, i32, i32
  }
  func.func @transform_4(%arg0: i32, %arg1: i32) -> (i32, i32) {
    %c0_i32 = arith.constant 0 : i32
    %c0_i32_0 = arith.constant 0 : i32
    %c0_i32_1 = arith.constant 0 : i32
    return %c0_i32, %c0_i32_0 : i32, i32
  }
  func.func @transform_5(%arg0: i32, %arg1: i32) -> (i32, i32, i32) {
    %c0_i32 = arith.constant 0 : i32
    %c0_i32_0 = arith.constant 0 : i32
    %c0_i32_1 = arith.constant 0 : i32
    return %arg0, %c0_i32, %c0_i32_0 : i32, i32, i32
  }
  func.func @transform_6(%arg0: i32, %arg1: i32) -> (i32, i32, i32, i32) {
    %c0_i32 = arith.constant 0 : i32
    %c0_i32_0 = arith.constant 0 : i32
    %c0_i32_1 = arith.constant 0 : i32
    return %arg0, %arg1, %c0_i32, %c0_i32_0 : i32, i32, i32, i32
  }
}

</mosaic_0001>

<llo_original>
// kernel: tpu_custom_call.1
$region0: #{tpu_custom_call.1}
  #allocation0 [shape = 'u32[]', space=smem, size = 0x4, offset = 0x4, fixed_abs, tag = 'smem constant byte address 0x4 - core index']
  #allocation1 [shape = 'u32[72,128]{1,0:T(1,128)}', space=vmem, size = 0x9000, scoped, tag = 'internal scratch']
  #allocation2 [shape = 'f32[8,32]{1,0:T(8,128)}', space=vmem, size = 0x1000, scoped, tag = 'scratch operand']
  %s0 = inlined_call_operand.vmem [shape: f32[2,8,32], index: 0, kind: input, shape index: {}]
  %s1 = inlined_call_operand.vmem [shape: f32[4,32,24], index: 1, kind: input, shape index: {}]
  %s2 = inlined_call_operand.vmem [shape: f32[4,1,24], index: 2, kind: input, shape index: {}]
  %s3 = inlined_call_operand.vmem [shape: f32[4,8,32], index: 3, kind: input, shape index: {}]
  %s4 = inlined_call_operand.vmem [shape: f32[1,32], index: 4, kind: input, shape index: {}]
  %s5 = inlined_call_operand.hbm [shape: f32[2,8,32], index: 5, kind: output, shape index: {0}]
  %s6 = inlined_call_operand.hbm [shape: f32[2,4,8,8], index: 6, kind: output, shape index: {1}]
  %7 = xla_tuple %s5, %s6
  %s8 = sld [smem:[#allocation0]]
  $region69: #{tpu_custom_call.1} parent=0
    _
  %s10 = ssub.s32 1, %s8
  %s11 = scalar_select 0, %s10, %s8
  $region1: #{tpu_custom_call.1} parent=0
    #allocation3 [shape = 'u8[8192]{0}', space=vmem, size = 0x2000, scoped, tag = 'output window, operand 0']
    #allocation4 [shape = 's32[2]{0}', space=sflag, size = 0x8, scoped, tag = 'scoped memory for tpu_custom_call.1']
    #allocation5 [shape = 'u8[8192]{0}', space=vmem, size = 0x2000, scoped, tag = 'output window, operand 1']
    #allocation6 [shape = 's32[2]{0}', space=sflag, size = 0x8, scoped, tag = 'scoped memory for tpu_custom_call.1']
    %12 = vsyncpa [#allocation4], 0
    %s13 = scalar_lea.sflag [#allocation4], 1
    %14 = vsyncpa %s13, 0
    %15 = vsyncpa [#allocation6], 0
    %s16 = scalar_lea.sflag [#allocation6], 1
    %17 = vsyncpa %s16, 0
    loop: start=0, step=1, limit=10
    $region2: #{tpu_custom_call.1} parent=1 // loop_pre_header
      _
    $region3: #{tpu_custom_call.1} parent=1 // loop_header
      %s19 = sphi 0, %s23
      %p20 = scmp.ge.s32.totalorder %s19, 10
      %s26 = sphi 0, %s38
      %s27 = sphi 0, %s34
      %s28 = sphi 0, %s26
      %s29 = sphi 0, %s27
      %s30 = sphi 0, %s28
      %s31 = sphi 0, %s29
      %s41 = sphi 0, %s43
      %s44 = sphi 0, %s41
      %s45 = sphi 0, %s44
      %s61 = sphi 0, %s45
      %s65 = sphi 0, %s65
      %s67 = sphi 0, %s65
      %s68 = sphi 0, %s67
      %s82 = sphi 0, %s68
      %s86 = sphi 0, %s86
      %s88 = sphi 0, %s86
      %s89 = sphi 0, %s88
      %s103 = sphi 0, %s89
      %s107 = sphi 0, %s107
      %s109 = sphi 0, %s107
      %s110 = sphi 0, %s109
      %s124 = sphi 0, %s110
      %s128 = sphi 0, %s128
      %s130 = sphi 0, %s128
      %s131 = sphi 0, %s130
      %s145 = sphi 0, %s131
      %s151 = sphi 0, %s153
      %s154 = sphi 0, %s151
      %s155 = sphi 0, %s154
      %s171 = sphi 0, %s155
      %s179 = sphi 0, %s181
      %s182 = sphi 0, %s179
      %s183 = sphi 0, %s182
      %s199 = sphi 0, %s183
    $region4: #{tpu_custom_call.1} parent=1 // loop_header_branch
      %22 = sbr.rel (%p20) target = $region8
    $region5: #{tpu_custom_call.1} parent=1 // loop_body
      %s24 = ssub.s32 %s19, 1
      %s25 = ssub.s32 %s19, 2
      %s32 = sadd.s32 1, %s27
      %p33 = scmp.ge.s32.totalorder %s32, 4
      %s34 = scalar_select %p33, 0, %s32
      %s35 = sadd.s32 1, %s26
      %s36 = scalar_select %p33, %s35, %s26
      %p37 = scmp.ge.s32.totalorder %s36, 2
      %s38 = scalar_select %p37, 0, %s36
      %s39 = ssub.s32 %s26, %s38
      %p40 = scmp.eq.s32.totalorder %s39, 0
      %s42 = sadd.s32 %s41, 1
      %s43 = scalar_select %p40, %s41, %s42
      %p46 = pneg %p40
      %p47 = scmp.eq.s32.totalorder %s19, 7
      %p48 = por %p46, %p47
      %p49 = scmp.ne.s32.totalorder %s41, %s44
      %p50 = scmp.eq.s32.totalorder %s19, 0
      %p51 = por %p49, %p50
      %p52 = scmp.ne.s32.totalorder %s41, %s44
      %p53 = scmp.eq.s32.totalorder %s24, 7
      %p54 = por %p52, %p53
      %p55 = scmp.ne.s32.totalorder %s44, %s45
      %p56 = scmp.eq.s32.totalorder %s24, 0
      %p57 = por %p55, %p56
      %p58 = scmp.ne.s32.totalorder %s44, %s45
      %p59 = scmp.eq.s32.totalorder %s25, 7
      %p60 = por %p58, %p59
      %p62 = scmp.ne.s32.totalorder %s45, %s61
      %p63 = scmp.eq.s32.totalorder %s25, 0
      %p64 = por %p62, %p63
      %s66 = sadd.s32 %s65, 1
      %p69 = scmp.eq.s32.totalorder %s19, 7
      %p70 = scmp.ne.s32.totalorder %s65, %s67
      %p71 = scmp.eq.s32.totalorder %s19, 0
      %p72 = por %p70, %p71
      %p73 = scmp.ne.s32.totalorder %s65, %s67
      %p74 = scmp.eq.s32.totalorder %s24, 7
      %p75 = por %p73, %p74
      %p76 = scmp.ne.s32.totalorder %s67, %s68
      %p77 = scmp.eq.s32.totalorder %s24, 0
      %p78 = por %p76, %p77
      %p79 = scmp.ne.s32.totalorder %s67, %s68
      %p80 = scmp.eq.s32.totalorder %s25, 7
      %p81 = por %p79, %p80
      %p83 = scmp.ne.s32.totalorder %s68, %s82
      %p84 = scmp.eq.s32.totalorder %s25, 0
      %p85 = por %p83, %p84
      %s87 = sadd.s32 %s86, 1
      %p90 = scmp.eq.s32.totalorder %s19, 7
      %p91 = scmp.ne.s32.totalorder %s86, %s88
      %p92 = scmp.eq.s32.totalorder %s19, 0
      %p93 = por %p91, %p92
      %p94 = scmp.ne.s32.totalorder %s86, %s88
      %p95 = scmp.eq.s32.totalorder %s24, 7
      %p96 = por %p94, %p95
      %p97 = scmp.ne.s32.totalorder %s88, %s89
      %p98 = scmp.eq.s32.totalorder %s24, 0
      %p99 = por %p97, %p98
      %p100 = scmp.ne.s32.totalorder %s88, %s89
      %p101 = scmp.eq.s32.totalorder %s25, 7
      %p102 = por %p100, %p101
      %p104 = scmp.ne.s32.totalorder %s89, %s103
      %p105 = scmp.eq.s32.totalorder %s25, 0
      %p106 = por %p104, %p105
      %s108 = sadd.s32 %s107, 1
      %p111 = scmp.eq.s32.totalorder %s19, 7
      %p112 = scmp.ne.s32.totalorder %s107, %s109
      %p113 = scmp.eq.s32.totalorder %s19, 0
      %p114 = por %p112, %p113
      %p115 = scmp.ne.s32.totalorder %s107, %s109
      %p116 = scmp.eq.s32.totalorder %s24, 7
      %p117 = por %p115, %p116
      %p118 = scmp.ne.s32.totalorder %s109, %s110
      %p119 = scmp.eq.s32.totalorder %s24, 0
      %p120 = por %p118, %p119
      %p121 = scmp.ne.s32.totalorder %s109, %s110
      %p122 = scmp.eq.s32.totalorder %s25, 7
      %p123 = por %p121, %p122
      %p125 = scmp.ne.s32.totalorder %s110, %s124
      %p126 = scmp.eq.s32.totalorder %s25, 0
      %p127 = por %p125, %p126
      %s129 = sadd.s32 %s128, 1
      %p132 = scmp.eq.s32.totalorder %s19, 7
      %p133 = scmp.ne.s32.totalorder %s128, %s130
      %p134 = scmp.eq.s32.totalorder %s19, 0
      %p135 = por %p133, %p134
      %p136 = scmp.ne.s32.totalorder %s128, %s130
      %p137 = scmp.eq.s32.totalorder %s24, 7
      %p138 = por %p136, %p137
      %p139 = scmp.ne.s32.totalorder %s130, %s131
      %p140 = scmp.eq.s32.totalorder %s24, 0
      %p141 = por %p139, %p140
      %p142 = scmp.ne.s32.totalorder %s130, %s131
      %p143 = scmp.eq.s32.totalorder %s25, 7
      %p144 = por %p142, %p143
      %p146 = scmp.ne.s32.totalorder %s131, %s145
      %p147 = scmp.eq.s32.totalorder %s25, 0
      %p148 = por %p146, %p147
      %s149 = ssub.s32 %s26, %s38
      %p150 = scmp.eq.s32.totalorder %s149, 0
      %s152 = sadd.s32 %s151, 1
      %s153 = scalar_select %p150, %s151, %s152
      %p156 = pneg %p150
      %p157 = scmp.eq.s32.totalorder %s19, 7
      %p158 = por %p156, %p157
      %p159 = scmp.ne.s32.totalorder %s151, %s154
      %p160 = scmp.eq.s32.totalorder %s19, 0
      %p161 = por %p159, %p160
      %p162 = scmp.ne.s32.totalorder %s151, %s154
      %p163 = scmp.eq.s32.totalorder %s24, 7
      %p164 = por %p162, %p163
      %p165 = scmp.ne.s32.totalorder %s154, %s155
      %p166 = scmp.eq.s32.totalorder %s24, 0
      %p167 = por %p165, %p166
      %p168 = scmp.ne.s32.totalorder %s154, %s155
      %p169 = scmp.eq.s32.totalorder %s25, 7
      %p170 = por %p168, %p169
      %p172 = scmp.ne.s32.totalorder %s155, %s171
      %p173 = scmp.eq.s32.totalorder %s25, 0
      %p174 = por %p172, %p173
      %s175 = ssub.s32 %s26, %s38
      %s176 = ssub.s32 %s27, %s34
      %s177 = sor.u32 %s175, %s176
      %p178 = scmp.eq.s32.totalorder %s177, 0
      %s180 = sadd.s32 %s179, 1
      %s181 = scalar_select %p178, %s179, %s180
      %p184 = pneg %p178
      %p185 = scmp.eq.s32.totalorder %s19, 7
      %p186 = por %p184, %p185
      %p187 = scmp.ne.s32.totalorder %s179, %s182
      %p188 = scmp.eq.s32.totalorder %s19, 0
      %p189 = por %p187, %p188
      %p190 = scmp.ne.s32.totalorder %s179, %s182
      %p191 = scmp.eq.s32.totalorder %s24, 7
      %p192 = por %p190, %p191
      %p193 = scmp.ne.s32.totalorder %s182, %s183
      %p194 = scmp.eq.s32.totalorder %s24, 0
      %p195 = por %p193, %p194
      %p196 = scmp.ne.s32.totalorder %s182, %s183
      %p197 = scmp.eq.s32.totalorder %s25, 7
      %p198 = por %p196, %p197
      %p200 = scmp.ne.s32.totalorder %s183, %s199
      %p201 = scmp.eq.s32.totalorder %s25, 0
      %p202 = por %p200, %p201
      %p203 = scmp.le.s32.totalorder 1, %s19
      %p204 = scmp.lt.s32.totalorder %s19, 9
      %p205 = pnand %p203, %p204
      %p206 = pneg %p205
      // Predicated region
      $region9: #{tpu_custom_call.1} parent=5 // pred_check
        _
      $region10: #{tpu_custom_call.1} parent=5 // pred_check_branch
        %208 = sbr.rel (%p205) target = $region12
      $region11: #{tpu_custom_call.1} parent=5 // pred_region
        %s209 = ssub.s32 %s19, 1
        // Predicated region
        $region13: #{tpu_custom_call.1} parent=11 // pred_check
          %p210 = pneg %p78
        $region14: #{tpu_custom_call.1} parent=11 // pred_check_branch
          %212 = sbr.rel (%p210) target = $region16
        $region15: #{tpu_custom_call.1} parent=11 // pred_region
          _
        $region16: #{tpu_custom_call.1} parent=11 // pred_fallthru
          _
        // Predicated region
        $region17: #{tpu_custom_call.1} parent=11 // pred_check
          %p213 = pneg %p99
        $region18: #{tpu_custom_call.1} parent=11 // pred_check_branch
          %215 = sbr.rel (%p213) target = $region20
        $region19: #{tpu_custom_call.1} parent=11 // pred_region
          _
        $region20: #{tpu_custom_call.1} parent=11 // pred_fallthru
          _
        // Predicated region
        $region21: #{tpu_custom_call.1} parent=11 // pred_check
          %p216 = pneg %p120
        $region22: #{tpu_custom_call.1} parent=11 // pred_check_branch
          %218 = sbr.rel (%p216) target = $region24
        $region23: #{tpu_custom_call.1} parent=11 // pred_region
          _
        $region24: #{tpu_custom_call.1} parent=11 // pred_fallthru
          _
        // Predicated region
        $region25: #{tpu_custom_call.1} parent=11 // pred_check
          %p219 = pneg %p141
        $region26: #{tpu_custom_call.1} parent=11 // pred_check_branch
          %221 = sbr.rel (%p219) target = $region28
        $region27: #{tpu_custom_call.1} parent=11 // pred_region
          _
        $region28: #{tpu_custom_call.1} parent=11 // pred_fallthru
          _
      $region12: #{tpu_custom_call.1} parent=5 // pred_fallthru
        _
      %p222 = scmp.lt.s32.totalorder %s19, 8
      // Predicated region
      $region29: #{tpu_custom_call.1} parent=5 // pred_check
        %p223 = pneg %p222
      $region30: #{tpu_custom_call.1} parent=5 // pred_check_branch
        %225 = sbr.rel (%p223) target = $region32
      $region31: #{tpu_custom_call.1} parent=5 // pred_region
        // Predicated region
        $region33: #{tpu_custom_call.1} parent=31 // pred_check
          %p226 = pneg %p51
        $region34: #{tpu_custom_call.1} parent=31 // pred_check_branch
          %228 = sbr.rel (%p226) target = $region36
        $region35: #{tpu_custom_call.1} parent=31 // pred_region
          %p229 = scmp.lt.s32.totalorder %s26, 1
          %s230 = scalar_select %p229, %s26, 1
          %s231 = smul.addr %s230, 8
          %s232 = scalar_lea.vmem %s0, %s231
        $region36: #{tpu_custom_call.1} parent=31 // pred_fallthru
          _
      $region32: #{tpu_custom_call.1} parent=5 // pred_fallthru
        _
      %p233 = scmp.le.s32.totalorder 1, %s19
      %p234 = scmp.lt.s32.totalorder %s19, 9
      %p235 = pnand %p233, %p234
      %p236 = pneg %p235
      // Predicated region
      $region37: #{tpu_custom_call.1} parent=5 // pred_check
        _
      $region38: #{tpu_custom_call.1} parent=5 // pred_check_branch
        %238 = sbr.rel (%p235) target = $region40
      $region39: #{tpu_custom_call.1} parent=5 // pred_region
        %s239 = ssub.s32 %s19, 1
        %p240 = scmp.lt.s32.totalorder %s28, 1
        %s241 = scalar_select %p240, %s28, 1
        %s242 = smul.addr %s241, 8
        %s243 = scalar_lea.vmem %s0, %s242
        %p244 = pneg %p57
        %p245 = pneg %p54
        %p246 = pneg %p78
        %p247 = pneg %p75
        %p248 = pneg %p99
        %p249 = pneg %p96
        %p250 = pneg %p120
        %p251 = pneg %p117
        %p252 = pneg %p141
        %p253 = pneg %p138
        %p254 = pneg %p167
        %p255 = pneg %p164
        %s256 = sand.u32 %s154, 1
        %s257 = scalar_lea.sflag [#allocation4], %s256
        %s258 = sand.u32 %s154, 1
        %s259 = smul.addr %s258, 8
        %s260 = scalar_lea.vmem [#allocation3], %s259
        %p261 = pneg %p195
        %p262 = pneg %p192
        %s263 = sand.u32 %s182, 1
        %s264 = scalar_lea.sflag [#allocation6], %s263
        %s265 = sand.u32 %s182, 1
        %s266 = smul.addr %s265, 8
        %s267 = scalar_lea.vmem [#allocation5], %s266
        %p268 = scmp.lt.s32.totalorder %s28, 1
        %s269 = scalar_select %p268, %s28, 1
        %s270 = smul.addr %s269, 8
        %s271 = scalar_lea.vmem %s0, %s270
        %p272 = scmp.eq.s32.totalorder %s29, 0
        // Predicated region
        $region41: #{tpu_custom_call.1} parent=39 // pred_check
          %p273 = pneg %p272
        $region42: #{tpu_custom_call.1} parent=39 // pred_check_branch
          %275 = sbr.rel (%p273) target = $region44
        $region43: #{tpu_custom_call.1} parent=39 // pred_region
          %vm276 = vcmask 261120
          %277 = vst.msk [vmem:[#allocation2] sm:$0xff] %vm276, 0.0
        $region44: #{tpu_custom_call.1} parent=39 // pred_fallthru
          _
        %v278 = vld [vmem:[%s271] sm:$0xff]
        %s279 = smul.u32 %s29, 32
        %s280 = scalar_lea.vmem %s1, %s279
        %v281 = vld [vmem:[%s280] sm:$0xff]
        %v282 = vld [vmem:[%s280 + $0x8] sm:$0xff]
        %v283 = vld [vmem:[%s280 + $0x10] sm:$0xff]
        %v284 = vld [vmem:[%s280 + $0x18] sm:$0xff]
        %s285 = scalar_lea.vmem %s2, %s29
        %v286 = vld [vmem:[%s285] sm:$0x1]
        %v288 = vperm.slane %v286, 0
        %vm290 = vcmask 261120
        %v292 = vsel %vm290, %v278, 0
        %294 = vmatpush.msra.mxu0 0.0
        %295 = vmatpush.msra.mxu0 0.0
        %296 = vmatpush.msra.mxu0 0.0
        %297 = vmatpush.msra.mxu0 0.0
        %298 = vmatpush.msra.mxu0 0.0
        %299 = vmatpush.msra.mxu0 0.0
        %300 = vmatpush.msra.mxu0 0.0
        %301 = vmatpush.msra.mxu0 0.0
        %302 = vmatpush.msra.mxu0 0.0
        %303 = vmatpush.msra.mxu0 0.0
        %304 = vmatpush.msra.mxu0 0.0
        %305 = vmatpush.msra.mxu0 0.0
        %306 = vmatpush.msra.mxu0 %v284
        %307 = vmatpush.msra.mxu0 %v283
        %308 = vmatpush.msra.mxu0 %v282
        %309 = vmatpush.msra.mxu0 %v281
        %310 = vmatmul.f32.gmra.mxu0 %v292
        %v311 = vpop.f32.mrf.mxu0
        %v312 = vadd.f32 %v288, %v311
        %313 = vdwg.mxu0
        %v314 = vmul.f32 %v312, 0.35355338
        %316 = vrot.lane.b32.xlu0 %v312, 120
        %v317 = vpop.permute.xlu0 %316
        %vm318 = vcmask 64512
        %v320 = vsel %vm318, %v314, 0
        %v322 = vsel %vm318, %v317, 0
        %324 = vmatpush.xpose.msra.mxu0 0.0
        %325 = vmatpush.xpose.msra.mxu0 0.0
        %326 = vmatpush.xpose.msra.mxu0 0.0
        %327 = vmatpush.xpose.msra.mxu0 0.0
        %328 = vmatpush.xpose.msra.mxu0 0.0
        %329 = vmatpush.xpose.msra.mxu0 0.0
        %330 = vmatpush.xpose.msra.mxu0 0.0
        %331 = vmatpush.xpose.msra.mxu0 0.0
        %332 = vmatpush.xpose.msra.mxu0 0.0
        %333 = vmatpush.xpose.msra.mxu0 0.0
        %334 = vmatpush.xpose.msra.mxu0 0.0
        %335 = vmatpush.xpose.msra.mxu0 0.0
        %336 = vmatpush.xpose.msra.mxu0 0.0
        %337 = vmatpush.xpose.msra.mxu0 0.0
        %338 = vmatpush.xpose.msra.mxu0 0.0
        %339 = vmatpush.xpose.msra.mxu0 %v322
        %340 = vmatmul.f32.gmra.mxu0 %v320
        %v341 = vpop.f32.mrf.mxu0
        %v342 = vadd.f32 0.0, %v341
        %343 = vdwg.mxu0
        %v344 = vsel %vm318, %v342, -inf
        %345 = vmax.xlane.f32.xlu0 %v344
        %v346 = vpop.xlane.xlu0 %345
        %v347 = vsub.f32 %v342, %v346
        %v348 = vmul.f32 %v347, 1.442695
        %v349 = vpow.pop %v348
        %v350 = vsel %vm318, %v349, 0.0
        %351 = vadd.xlane.f32.xlu0 %v350
        %v352 = vpop.xlane.xlu0 %351
        %v353 = vrcp.pop %v352
        %v354 = vmul.f32 %v349, %v353
        %355 = vst.msk [vmem:[%s267] sm:$0xff] %vm318, %v354
        %356 = vrot.lane.b32.xlu0 %v312, 112
        %v357 = vpop.permute.xlu0 %356
        %v360 = vsel %vm318, %v354, 0
        %362 = vmatpush.msra.mxu0 0.0
        %363 = vmatpush.msra.mxu0 0.0
        %364 = vmatpush.msra.mxu0 0.0
        %365 = vmatpush.msra.mxu0 0.0
        %366 = vmatpush.msra.mxu0 0.0
        %367 = vmatpush.msra.mxu0 0.0
        %368 = vmatpush.msra.mxu0 0.0
        %369 = vmatpush.msra.mxu0 0.0
        %370 = vmatpush.msra.mxu0 0.0
        %371 = vmatpush.msra.mxu0 0.0
        %372 = vmatpush.msra.mxu0 0.0
        %373 = vmatpush.msra.mxu0 0.0
        %374 = vmatpush.msra.mxu0 0.0
        %375 = vmatpush.msra.mxu0 0.0
        %376 = vmatpush.msra.mxu0 0.0
        %377 = vmatpush.msra.mxu0 %v357
        %378 = vmatmul.f32.gmra.mxu0 %v360
        %v379 = vpop.f32.mrf.mxu0
        %v380 = vadd.f32 0.0, %v379
        %381 = vdwg.mxu0
        %v382 = vld [vmem:[#allocation2] sm:$0xff]
        %s383 = smul.u32 %s29, 8
        %s384 = scalar_lea.vmem %s3, %s383
        %v385 = vld [vmem:[%s384] sm:$0xff]
        %v387 = vsel %vm318, %v380, 0
        %389 = vmatpush.msra.mxu0 0.0
        %390 = vmatpush.msra.mxu0 0.0
        %391 = vmatpush.msra.mxu0 0.0
        %392 = vmatpush.msra.mxu0 0.0
        %393 = vmatpush.msra.mxu0 0.0
        %394 = vmatpush.msra.mxu0 0.0
        %395 = vmatpush.msra.mxu0 0.0
        %396 = vmatpush.msra.mxu0 0.0
        %397 = vmatpush.msra.mxu0 0.0
        %398 = vmatpush.msra.mxu0 0.0
        %399 = vmatpush.msra.mxu0 0.0
        %400 = vmatpush.msra.mxu0 0.0
        %401 = vmatpush.msra.mxu0 0.0
        %402 = vmatpush.msra.mxu0 0.0
        %403 = vmatpush.msra.mxu0 0.0
        %404 = vmatpush.msra.mxu0 %v385
        %405 = vmatmul.f32.gmra.mxu0 %v387
        %v406 = vpop.f32.mrf.mxu0
        %v407 = vadd.f32 0.0, %v406
        %408 = vdwg.mxu0
        %v409 = vadd.f32 %v382, %v407
        %410 = vst.msk [vmem:[#allocation2] sm:$0xff] %vm290, %v409
        %p411 = scmp.eq.s32.totalorder %s29, 3
        // Predicated region
        $region45: #{tpu_custom_call.1} parent=39 // pred_check
          %p412 = pneg %p411
        $region46: #{tpu_custom_call.1} parent=39 // pred_check_branch
          %414 = sbr.rel (%p412) target = $region48
        $region47: #{tpu_custom_call.1} parent=39 // pred_region
          %v415 = vld [vmem:[#allocation2] sm:$0xff]
          %v416 = vld [vmem:[%s4] sm:$0x1]
          %v418 = vperm.slane %v416, 0
          %v420 = vadd.f32 %v415, %v418
          %421 = vst.msk [vmem:[%s260] sm:$0xff] %vm290, %v420
        $region48: #{tpu_custom_call.1} parent=39 // pred_fallthru
          _
        %s422 = sand.u32 %s154, 1
        %s423 = scalar_lea.sflag [#allocation4], %s422
        %s424 = sand.u32 %s154, 1
        %s425 = smul.addr %s424, 8
        %s426 = scalar_lea.vmem [#allocation3], %s425
        %s427 = sand.u32 %s182, 1
        %s428 = scalar_lea.sflag [#allocation6], %s427
        %s429 = sand.u32 %s182, 1
        %s430 = smul.addr %s429, 8
        %s431 = scalar_lea.vmem [#allocation5], %s430
        // Predicated region
        $region49: #{tpu_custom_call.1} parent=39 // pred_check
          %p432 = pneg %p164
        $region50: #{tpu_custom_call.1} parent=39 // pred_check_branch
          %434 = sbr.rel (%p432) target = $region52
        $region51: #{tpu_custom_call.1} parent=39 // pred_region
          %436 = vsyncadd %s423, 0
          %s437 = smul.addr %s28, 8
          %s438 = scalar_lea.hbm %s5, %s437
          %s440 = sshll.u32 %s426, 4
          %s441 = int_to_ptr.vmem [resolvable:$true] %s440
          %s442 = sshll.u32 %s438, 4
          %s443 = int_to_ptr.hbm [resolvable:$true] %s442
          %445 = dma.vmem_to_hbm [thread:$0]  %s441, 128, %s443, %s423
        $region52: #{tpu_custom_call.1} parent=39 // pred_fallthru
          _
        // Predicated region
        $region53: #{tpu_custom_call.1} parent=39 // pred_check
          %p446 = pneg %p192
        $region54: #{tpu_custom_call.1} parent=39 // pred_check_branch
          %448 = sbr.rel (%p446) target = $region56
        $region55: #{tpu_custom_call.1} parent=39 // pred_region
          %450 = vsyncadd %s428, 0
          %s451 = smul.addr %s28, 4
          %s452 = sadd.s32 %s29, %s451
          %s453 = smul.addr %s452, 8
          %s454 = scalar_lea.hbm %s6, %s453
          %s456 = sshll.u32 %s431, 4
          %s457 = int_to_ptr.vmem [resolvable:$true] %s456
          %s458 = sshll.u32 %s454, 4
          %s459 = int_to_ptr.hbm [resolvable:$true] %s458
          %461 = dma.vmem_to_hbm [thread:$0]  %s457, 128, %s459, %s428
        $region56: #{tpu_custom_call.1} parent=39 // pred_fallthru
          _
      $region40: #{tpu_custom_call.1} parent=5 // pred_fallthru
        _
      %p462 = scmp.le.s32.totalorder 2, %s19
      // Predicated region
      $region57: #{tpu_custom_call.1} parent=5 // pred_check
        %p463 = pneg %p462
      $region58: #{tpu_custom_call.1} parent=5 // pred_check_branch
        %465 = sbr.rel (%p463) target = $region60
      $region59: #{tpu_custom_call.1} parent=5 // pred_region
        %s466 = ssub.s32 %s19, 2
        // Predicated region
        $region61: #{tpu_custom_call.1} parent=59 // pred_check
          %p467 = pneg %p170
        $region62: #{tpu_custom_call.1} parent=59 // pred_check_branch
          %469 = sbr.rel (%p467) target = $region64
        $region63: #{tpu_custom_call.1} parent=59 // pred_region
          %s470 = sand.u32 %s155, 1
          %s471 = scalar_lea.sflag [#allocation4], %s470
          %s472 = sand.u32 %s155, 1
          %s473 = smul.addr %s472, 8
          %s474 = scalar_lea.vmem [#allocation3], %s473
          %476 = dma.done %s471, 128
        $region64: #{tpu_custom_call.1} parent=59 // pred_fallthru
          _
        // Predicated region
        $region65: #{tpu_custom_call.1} parent=59 // pred_check
          %p477 = pneg %p198
        $region66: #{tpu_custom_call.1} parent=59 // pred_check_branch
          %479 = sbr.rel (%p477) target = $region68
        $region67: #{tpu_custom_call.1} parent=59 // pred_region
          %s480 = sand.u32 %s183, 1
          %s481 = scalar_lea.sflag [#allocation6], %s480
          %s482 = sand.u32 %s183, 1
          %s483 = smul.addr %s482, 8
          %s484 = scalar_lea.vmem [#allocation5], %s483
          %486 = dma.done %s481, 128
        $region68: #{tpu_custom_call.1} parent=59 // pred_fallthru
          _
      $region60: #{tpu_custom_call.1} parent=5 // pred_fallthru
        _
    $region6: #{tpu_custom_call.1} parent=1 // loop_footer
      %s23 = sadd.s32 1, %s19
    $region7: #{tpu_custom_call.1} parent=1 // loop_footer_branch
      %18 = sbr.rel target = $region3
    $region8: #{tpu_custom_call.1} parent=1 // loop_exit
      _
    %487 = vsyncpa [#allocation4], 1
    %s488 = scalar_lea.sflag [#allocation4], 1
    %489 = vsyncpa %s488, 1
    %490 = vsyncpa [#allocation6], 1
    %s491 = scalar_lea.sflag [#allocation6], 1
    %492 = vsyncpa %s491, 1

</llo_original>
